<compile_context>
chip_gen: v6e
topology: v6e:2x2x1
jax: 0.10.0
libtpu: 0.0.40
codegen_flags: <defaults>
</compile_context>

<pallas_src>
import jax
import jax.numpy as jnp
from jax.experimental import pallas as pl
from jax.experimental.pallas import tpu as pltpu

EPS = 1e-5


def _bn_fold(y, g, b, inv_m):
    """Training-mode BatchNorm folded to one per-channel scale/shift. y: (C, M)."""
    s = jnp.sum(y, axis=1, keepdims=True)
    ss = jnp.sum(y * y, axis=1, keepdims=True)
    mean = s * inv_m
    var = ss * inv_m - mean * mean          # single-pass E[x^2] - E[x]^2
    scale = g * jax.lax.rsqrt(var + EPS)
    shift = b - mean * scale
    return y * scale + shift


def bottleneck_forward(x_nchw, w1, g1, b1, w2, g2, b2, w3, g3, b3,
                       *, mxu_dtype=jnp.float32):
    """Fused Bottleneck forward (stride=1, no downsample). x: (N, Cin, H, W) -> NCHW."""
    n, cin, h, w = x_nchw.shape
    planes = w1.shape[1]
    cout = w3.shape[1]
    assert cin == cout, "residual add requires inplanes == 4*planes (no downsample)"
    m = n * h * w
    inv_m = 1.0 / m

    # Channel-major (C, M): M on the lane axis -> lane-dense loads/stores everywhere.
    x2d = jnp.transpose(x_nchw, (1, 0, 2, 3)).reshape(cin, m)

    # Pad conv1-output channels to a sublane multiple so every 3x3 tap block is an
    # aligned 8-row group (register concat = pure vreg placement, no shuffles).
    planes_p = -(-planes // 8) * 8
    pad = planes_p - planes
    w1t = jnp.pad(w1, ((0, 0), (0, pad))).T                       # (planes_p, cin)
    g1p = jnp.pad(g1, (0, pad)).reshape(-1, 1)
    b1p = jnp.pad(b1, (0, pad)).reshape(-1, 1)
    w2t = jnp.pad(w2, ((0, 0), (0, 0), (0, pad), (0, 0))) \
             .reshape(9 * planes_p, planes).T                     # (planes, 9*planes_p)
    g2p, b2p = g2.reshape(-1, 1), b2.reshape(-1, 1)
    w3t = w3.T                                                    # (cout, planes)
    g3p, b3p = g3.reshape(-1, 1), b3.reshape(-1, 1)

    pow2 = (w & (w - 1)) == 0 and (h & (h - 1)) == 0

    # TODO(synk): on v6e/v7x set mxu_dtype=jnp.bfloat16 for MXU peak; kept f32
    #             here so the 1e-3 reference tolerance holds.
    def mxu_dot(a, b_):
        return jnp.dot(a.astype(mxu_dtype), b_.astype(mxu_dtype),
                       preferred_element_type=jnp.float32)

    def kernel(x_ref, w1_ref, g1_ref, b1_ref, w2_ref, g2_ref, b2_ref,
               w3_ref, g3_ref, b3_ref, o_ref):
        # ---- conv1 (1x1) + bn1 + relu ----------------------------- (planes_p, M)
        y1 = mxu_dot(w1_ref[...], x_ref[...])
        y1 = jnp.maximum(_bn_fold(y1, g1_ref[...], b1_ref[...], inv_m), 0.0)

        # ---- conv2 (3x3, stride 1, pad 1) + bn2 + relu -----------------------
        # Pixel coordinates along the lane (M) axis, computed once for all taps.
        col = jax.lax.broadcasted_iota(jnp.int32, (1, m), 1)
        if pow2:
            px = col & (w - 1)
            py = (col >> (w.bit_length() - 1)) & (h - 1)
        else:
            px = col % w
            py = (col // w) % h
        row_ok = {-1: py >= 1, 0: None, 1: py < h - 1}
        col_ok = {-1: px >= 1, 0: None, 1: px < w - 1}

        taps = []
        for dy in (-1, 0, 1):                      # static unroll over the 9 taps
            for dx in (-1, 0, 1):
                shift = dy * w + dx
                v = y1 if shift == 0 else pltpu.roll(y1, (-shift) % m, axis=1)
                masks = [mk for mk in (row_ok[dy], col_ok[dx]) if mk is not None]
                if masks:
                    mask = masks[0] & masks[1] if len(masks) == 2 else masks[0]
                    v = jnp.where(mask, v, 0.0)
                taps.append(v)
        tap = jnp.concatenate(taps, axis=0)        # (9*planes_p, M), in registers

        y2 = mxu_dot(w2_ref[...], tap)             # single K = 9*planes_p MXU matmul
        y2 = jnp.maximum(_bn_fold(y2, g2_ref[...], b2_ref[...], inv_m), 0.0)

        # ---- conv3 (1x1) + bn3 + residual add + relu -------------------------
        y3 = mxu_dot(w3_ref[...], y2)
        y3 = _bn_fold(y3, g3_ref[...], b3_ref[...], inv_m)
        # x_ref intentionally re-read here (not held live across the kernel).
        o_ref[...] = jnp.maximum(y3 + x_ref[...], 0.0).astype(o_ref.dtype)

    vmem = pl.BlockSpec(memory_space=pltpu.MemorySpace.VMEM)
    out2d = pl.pallas_call(
        kernel,
        out_shape=jax.ShapeDtypeStruct((cout, m), x2d.dtype),
        in_specs=[vmem] * 10,
        out_specs=vmem,
        input_output_aliases={0: 0},               # output reuses the x2d HBM buffer
        compiler_params=pltpu.CompilerParams(vmem_limit_bytes=32 * 1024 * 1024),
    )(x2d, w1t, g1p, b1p, w2t, g2p, b2p, w3t, g3p, b3p)

    # TODO(synk): for production activation sizes add an M-axis grid (halo lanes
    #             for the 3x3 taps + two-pass sum/sum-sq BN accumulators, M axis
    #             marked "parallel" for v7x's two TensorCores, tile sized against
    #             v7x's 64 MiB VMEM); at these shapes one fused invocation is
    #             both correct and fastest.
    return jnp.transpose(out2d.reshape(cout, n, h, w), (1, 0, 2, 3))


# ----------------------------- reference ------------------------------------

def _ref_bn(y_nhwc, g, b):
    mean = y_nhwc.mean(axis=(0, 1, 2))
    var = ((y_nhwc - mean) ** 2).mean(axis=(0, 1, 2))
    return (y_nhwc - mean) / jnp.sqrt(var + EPS) * g + b


def reference(x_nchw, w1, g1, b1, w2, g2, b2, w3, g3, b3):
    x = jnp.transpose(x_nchw, (0, 2, 3, 1))
    dn = ("NHWC", "HWIO", "NHWC")
    o = jax.lax.conv_general_dilated(x, w1.reshape(1, 1, *w1.shape), (1, 1),
                                     "VALID", dimension_numbers=dn)
    o = jnp.maximum(_ref_bn(o, g1, b1), 0.0)
    o = jax.lax.conv_general_dilated(o, w2, (1, 1), "SAME",
                                     dimension_numbers=dn)
    o = jnp.maximum(_ref_bn(o, g2, b2), 0.0)
    o = jax.lax.conv_general_dilated(o, w3.reshape(1, 1, *w3.shape), (1, 1),
                                     "VALID", dimension_numbers=dn)
    o = jnp.maximum(_ref_bn(o, g3, b3) + x, 0.0)
    return jnp.transpose(o, (0, 3, 1, 2))


# ------------------------------- main ----------------------------------------

if __name__ == "__main__":
    key = jax.random.PRNGKey(0)
    kx, k1, k2, k3 = jax.random.split(key, 4)

    # Bottleneck(inplanes=16, planes=4): expansion=4 so the residual add is valid.
    N, inplanes, planes, H, W = 2, 16, 4, 16, 16

    x = jax.random.normal(kx, (N, inplanes, H, W), jnp.float32)

    # conv weights stored as (Cin, Cout) / (KH, KW, Cin, Cout)
    w1 = 0.1 * jax.random.normal(k1, (inplanes, planes), jnp.float32)
    w2 = 0.1 * jax.random.normal(k2, (3, 3, planes, planes), jnp.float32)
    w3 = 0.1 * jax.random.normal(k3, (planes, planes * 4), jnp.float32)
    # BatchNorm affine params: PyTorch default init (gamma=1, beta=0)
    g1, b1 = jnp.ones((planes,), jnp.float32), jnp.zeros((planes,), jnp.float32)
    g2, b2 = jnp.ones((planes,), jnp.float32), jnp.zeros((planes,), jnp.float32)
    g3 = jnp.ones((planes * 4,), jnp.float32)
    b3 = jnp.zeros((planes * 4,), jnp.float32)

    fwd = jax.jit(bottleneck_forward)
    out = jax.block_until_ready(fwd(x, w1, g1, b1, w2, g2, b2, w3, g3, b3))

    ref = reference(x, w1, g1, b1, w2, g2, b2, w3, g3, b3)
    assert out.shape == (N, planes * 4, H, W)
    assert jnp.allclose(out, ref, atol=1e-3, rtol=1e-3), "mismatch vs reference"

    print("KERNEL_OK")
</pallas_src>

<mosaic_0001>
module attributes {stable_mosaic.version = 11 : i64} {
  func.func @kernel(%arg0: memref<16x512xf32, #tpu.memory_space<vmem>>, %arg1: memref<8x16xf32, #tpu.memory_space<vmem>>, %arg2: memref<8x1xf32, #tpu.memory_space<vmem>>, %arg3: memref<8x1xf32, #tpu.memory_space<vmem>>, %arg4: memref<4x72xf32, #tpu.memory_space<vmem>>, %arg5: memref<4x1xf32, #tpu.memory_space<vmem>>, %arg6: memref<4x1xf32, #tpu.memory_space<vmem>>, %arg7: memref<16x4xf32, #tpu.memory_space<vmem>>, %arg8: memref<16x1xf32, #tpu.memory_space<vmem>>, %arg9: memref<16x1xf32, #tpu.memory_space<vmem>>, %arg10: memref<16x512xf32, #tpu.memory_space<vmem>>) attributes {dimension_semantics = [], scalar_prefetch = 0 : i64, scratch_operands = 0 : i64, tpu.core_type = #tpu.core_type<tc>} {
    %c0 = arith.constant 0 : index
    %c0_0 = arith.constant 0 : index
    %0 = vector.load %arg1[%c0, %c0_0] : memref<8x16xf32, #tpu.memory_space<vmem>>, vector<8x16xf32>
    %c0_1 = arith.constant 0 : index
    %c0_2 = arith.constant 0 : index
    %1 = vector.load %arg0[%c0_1, %c0_2] : memref<16x512xf32, #tpu.memory_space<vmem>>, vector<16x512xf32>
    %cst = arith.constant dense<0.000000e+00> : vector<8x512xf32>
    %2 = tpu.matmul %0, %1, %cst {dimension_numbers = #tpu.dot_dimension_numbers<[1], [0], [0], [1], [0, 0, 1, 1], [], []>} : vector<8x16xf32>, vector<16x512xf32>, vector<8x512xf32> -> vector<8x512xf32>
    %c0_3 = arith.constant 0 : index
    %c0_4 = arith.constant 0 : index
    %3 = vector.load %arg2[%c0_3, %c0_4] : memref<8x1xf32, #tpu.memory_space<vmem>>, vector<8x1xf32>
    %c0_5 = arith.constant 0 : index
    %c0_6 = arith.constant 0 : index
    %4 = vector.load %arg3[%c0_5, %c0_6] : memref<8x1xf32, #tpu.memory_space<vmem>>, vector<8x1xf32>
    %cst_7 = arith.constant dense<0.000000e+00> : vector<8xf32>
    %5 = vector.multi_reduction <add>, %2, %cst_7 [1] : vector<8x512xf32> to vector<8xf32>
    %6 = vector.shape_cast %5 : vector<8xf32> to vector<8x1xf32>
    %7 = arith.mulf %2, %2 : vector<8x512xf32>
    %cst_8 = arith.constant dense<0.000000e+00> : vector<8xf32>
    %8 = vector.multi_reduction <add>, %7, %cst_8 [1] : vector<8x512xf32> to vector<8xf32>
    %9 = vector.shape_cast %8 : vector<8xf32> to vector<8x1xf32>
    %cst_9 = arith.constant 0.001953125 : f32
    %10 = vector.broadcast %cst_9 : f32 to vector<8x1xf32>
    %11 = arith.mulf %6, %10 : vector<8x1xf32>
    %cst_10 = arith.constant 0.001953125 : f32
    %12 = vector.broadcast %cst_10 : f32 to vector<8x1xf32>
    %13 = arith.mulf %9, %12 : vector<8x1xf32>
    %14 = arith.mulf %11, %11 : vector<8x1xf32>
    %15 = arith.subf %13, %14 : vector<8x1xf32>
    %cst_11 = arith.constant 9.99999974E-6 : f32
    %16 = vector.broadcast %cst_11 : f32 to vector<8x1xf32>
    %17 = arith.addf %15, %16 : vector<8x1xf32>
    %18 = math.rsqrt %17 : vector<8x1xf32>
    %19 = arith.mulf %3, %18 : vector<8x1xf32>
    %20 = arith.mulf %11, %19 : vector<8x1xf32>
    %21 = arith.subf %4, %20 : vector<8x1xf32>
    %22 = vector.broadcast %19 : vector<8x1xf32> to vector<8x512xf32>
    %23 = arith.mulf %2, %22 : vector<8x512xf32>
    %24 = vector.broadcast %21 : vector<8x1xf32> to vector<8x512xf32>
    %25 = arith.addf %23, %24 : vector<8x512xf32>
    %cst_12 = arith.constant 0.000000e+00 : f32
    %26 = vector.broadcast %cst_12 : f32 to vector<8x512xf32>
    %27 = arith.maximumf %25, %26 : vector<8x512xf32>
    %28 = tpu.iota {dimensions = array<i32: 1>} : vector<1x512xi32>
    %c15_i32 = arith.constant 15 : i32
    %29 = vector.broadcast %c15_i32 : i32 to vector<1x512xi32>
    %30 = arith.andi %28, %29 : vector<1x512xi32>
    %c4_i32 = arith.constant 4 : i32
    %31 = vector.broadcast %c4_i32 : i32 to vector<1x512xi32>
    %32 = arith.shrsi %28, %31 : vector<1x512xi32>
    %c15_i32_13 = arith.constant 15 : i32
    %33 = vector.broadcast %c15_i32_13 : i32 to vector<1x512xi32>
    %34 = arith.andi %32, %33 : vector<1x512xi32>
    %c1_i32 = arith.constant 1 : i32
    %35 = vector.broadcast %c1_i32 : i32 to vector<1x512xi32>
    %36 = arith.cmpi sge, %34, %35 : vector<1x512xi32>
    %c15_i32_14 = arith.constant 15 : i32
    %37 = vector.broadcast %c15_i32_14 : i32 to vector<1x512xi32>
    %38 = arith.cmpi slt, %34, %37 : vector<1x512xi32>
    %c1_i32_15 = arith.constant 1 : i32
    %39 = vector.broadcast %c1_i32_15 : i32 to vector<1x512xi32>
    %40 = arith.cmpi sge, %30, %39 : vector<1x512xi32>
    %c15_i32_16 = arith.constant 15 : i32
    %41 = vector.broadcast %c15_i32_16 : i32 to vector<1x512xi32>
    %42 = arith.cmpi slt, %30, %41 : vector<1x512xi32>
    %c17_i32 = arith.constant 17 : i32
    %43 = tpu.dynamic_rotate %27 by %c17_i32 dim 1 : vector<8x512xf32>, i32 -> vector<8x512xf32>
    %44 = arith.andi %36, %40 : vector<1x512xi1>
    %cst_17 = arith.constant 0.000000e+00 : f32
    %45 = vector.shape_cast %44 : vector<1x512xi1> to vector<1x512xi1>
    %46 = vector.broadcast %45 : vector<1x512xi1> to vector<8x512xi1>
    %47 = vector.broadcast %cst_17 : f32 to vector<8x512xf32>
    %48 = arith.select %46, %43, %47 : vector<8x512xi1>, vector<8x512xf32>
    %c16_i32 = arith.constant 16 : i32
    %49 = tpu.dynamic_rotate %27 by %c16_i32 dim 1 : vector<8x512xf32>, i32 -> vector<8x512xf32>
    %cst_18 = arith.constant 0.000000e+00 : f32
    %50 = vector.shape_cast %36 : vector<1x512xi1> to vector<1x512xi1>
    %51 = vector.broadcast %50 : vector<1x512xi1> to vector<8x512xi1>
    %52 = vector.broadcast %cst_18 : f32 to vector<8x512xf32>
    %53 = arith.select %51, %49, %52 : vector<8x512xi1>, vector<8x512xf32>
    %c15_i32_19 = arith.constant 15 : i32
    %54 = tpu.dynamic_rotate %27 by %c15_i32_19 dim 1 : vector<8x512xf32>, i32 -> vector<8x512xf32>
    %55 = arith.andi %36, %42 : vector<1x512xi1>
    %cst_20 = arith.constant 0.000000e+00 : f32
    %56 = vector.shape_cast %55 : vector<1x512xi1> to vector<1x512xi1>
    %57 = vector.broadcast %56 : vector<1x512xi1> to vector<8x512xi1>
    %58 = vector.broadcast %cst_20 : f32 to vector<8x512xf32>
    %59 = arith.select %57, %54, %58 : vector<8x512xi1>, vector<8x512xf32>
    %c1_i32_21 = arith.constant 1 : i32
    %60 = tpu.dynamic_rotate %27 by %c1_i32_21 dim 1 : vector<8x512xf32>, i32 -> vector<8x512xf32>
    %cst_22 = arith.constant 0.000000e+00 : f32
    %61 = vector.shape_cast %40 : vector<1x512xi1> to vector<1x512xi1>
    %62 = vector.broadcast %61 : vector<1x512xi1> to vector<8x512xi1>
    %63 = vector.broadcast %cst_22 : f32 to vector<8x512xf32>
    %64 = arith.select %62, %60, %63 : vector<8x512xi1>, vector<8x512xf32>
    %c511_i32 = arith.constant 511 : i32
    %65 = tpu.dynamic_rotate %27 by %c511_i32 dim 1 : vector<8x512xf32>, i32 -> vector<8x512xf32>
    %cst_23 = arith.constant 0.000000e+00 : f32
    %66 = vector.shape_cast %42 : vector<1x512xi1> to vector<1x512xi1>
    %67 = vector.broadcast %66 : vector<1x512xi1> to vector<8x512xi1>
    %68 = vector.broadcast %cst_23 : f32 to vector<8x512xf32>
    %69 = arith.select %67, %65, %68 : vector<8x512xi1>, vector<8x512xf32>
    %c497_i32 = arith.constant 497 : i32
    %70 = tpu.dynamic_rotate %27 by %c497_i32 dim 1 : vector<8x512xf32>, i32 -> vector<8x512xf32>
    %71 = arith.andi %38, %40 : vector<1x512xi1>
    %cst_24 = arith.constant 0.000000e+00 : f32
    %72 = vector.shape_cast %71 : vector<1x512xi1> to vector<1x512xi1>
    %73 = vector.broadcast %72 : vector<1x512xi1> to vector<8x512xi1>
    %74 = vector.broadcast %cst_24 : f32 to vector<8x512xf32>
    %75 = arith.select %73, %70, %74 : vector<8x512xi1>, vector<8x512xf32>
    %c496_i32 = arith.constant 496 : i32
    %76 = tpu.dynamic_rotate %27 by %c496_i32 dim 1 : vector<8x512xf32>, i32 -> vector<8x512xf32>
    %cst_25 = arith.constant 0.000000e+00 : f32
    %77 = vector.shape_cast %38 : vector<1x512xi1> to vector<1x512xi1>
    %78 = vector.broadcast %77 : vector<1x512xi1> to vector<8x512xi1>
    %79 = vector.broadcast %cst_25 : f32 to vector<8x512xf32>
    %80 = arith.select %78, %76, %79 : vector<8x512xi1>, vector<8x512xf32>
    %c495_i32 = arith.constant 495 : i32
    %81 = tpu.dynamic_rotate %27 by %c495_i32 dim 1 : vector<8x512xf32>, i32 -> vector<8x512xf32>
    %82 = arith.andi %38, %42 : vector<1x512xi1>
    %cst_26 = arith.constant 0.000000e+00 : f32
    %83 = vector.shape_cast %82 : vector<1x512xi1> to vector<1x512xi1>
    %84 = vector.broadcast %83 : vector<1x512xi1> to vector<8x512xi1>
    %85 = vector.broadcast %cst_26 : f32 to vector<8x512xf32>
    %86 = arith.select %84, %81, %85 : vector<8x512xi1>, vector<8x512xf32>
    %87 = tpu.concatenate %48, %53, %59, %64, %27, %69, %75, %80, %86 in 0 : vector<8x512xf32>, vector<8x512xf32>, vector<8x512xf32>, vector<8x512xf32>, vector<8x512xf32>, vector<8x512xf32>, vector<8x512xf32>, vector<8x512xf32>, vector<8x512xf32> -> vector<72x512xf32>
    %c0_27 = arith.constant 0 : index
    %c0_28 = arith.constant 0 : index
    %88 = vector.load %arg4[%c0_27, %c0_28] : memref<4x72xf32, #tpu.memory_space<vmem>>, vector<4x72xf32>
    %cst_29 = arith.constant dense<0.000000e+00> : vector<4x512xf32>
    %89 = tpu.matmul %88, %87, %cst_29 {dimension_numbers = #tpu.dot_dimension_numbers<[1], [0], [0], [1], [0, 0, 1, 1], [], []>} : vector<4x72xf32>, vector<72x512xf32>, vector<4x512xf32> -> vector<4x512xf32>
    %c0_30 = arith.constant 0 : index
    %c0_31 = arith.constant 0 : index
    %90 = vector.load %arg5[%c0_30, %c0_31] : memref<4x1xf32, #tpu.memory_space<vmem>>, vector<4x1xf32>
    %c0_32 = arith.constant 0 : index
    %c0_33 = arith.constant 0 : index
    %91 = vector.load %arg6[%c0_32, %c0_33] : memref<4x1xf32, #tpu.memory_space<vmem>>, vector<4x1xf32>
    %cst_34 = arith.constant dense<0.000000e+00> : vector<4xf32>
    %92 = vector.multi_reduction <add>, %89, %cst_34 [1] : vector<4x512xf32> to vector<4xf32>
    %93 = vector.shape_cast %92 : vector<4xf32> to vector<4x1xf32>
    %94 = arith.mulf %89, %89 : vector<4x512xf32>
    %cst_35 = arith.constant dense<0.000000e+00> : vector<4xf32>
    %95 = vector.multi_reduction <add>, %94, %cst_35 [1] : vector<4x512xf32> to vector<4xf32>
    %96 = vector.shape_cast %95 : vector<4xf32> to vector<4x1xf32>
    %cst_36 = arith.constant 0.001953125 : f32
    %97 = vector.broadcast %cst_36 : f32 to vector<4x1xf32>
    %98 = arith.mulf %93, %97 : vector<4x1xf32>
    %cst_37 = arith.constant 0.001953125 : f32
    %99 = vector.broadcast %cst_37 : f32 to vector<4x1xf32>
    %100 = arith.mulf %96, %99 : vector<4x1xf32>
    %101 = arith.mulf %98, %98 : vector<4x1xf32>
    %102 = arith.subf %100, %101 : vector<4x1xf32>
    %cst_38 = arith.constant 9.99999974E-6 : f32
    %103 = vector.broadcast %cst_38 : f32 to vector<4x1xf32>
    %104 = arith.addf %102, %103 : vector<4x1xf32>
    %105 = math.rsqrt %104 : vector<4x1xf32>
    %106 = arith.mulf %90, %105 : vector<4x1xf32>
    %107 = arith.mulf %98, %106 : vector<4x1xf32>
    %108 = arith.subf %91, %107 : vector<4x1xf32>
    %109 = vector.broadcast %106 : vector<4x1xf32> to vector<4x512xf32>
    %110 = arith.mulf %89, %109 : vector<4x512xf32>
    %111 = vector.broadcast %108 : vector<4x1xf32> to vector<4x512xf32>
    %112 = arith.addf %110, %111 : vector<4x512xf32>
    %cst_39 = arith.constant 0.000000e+00 : f32
    %113 = vector.broadcast %cst_39 : f32 to vector<4x512xf32>
    %114 = arith.maximumf %112, %113 : vector<4x512xf32>
    %c0_40 = arith.constant 0 : index
    %c0_41 = arith.constant 0 : index
    %115 = vector.load %arg7[%c0_40, %c0_41] : memref<16x4xf32, #tpu.memory_space<vmem>>, vector<16x4xf32>
    %cst_42 = arith.constant dense<0.000000e+00> : vector<16x512xf32>
    %116 = tpu.matmul %115, %114, %cst_42 {dimension_numbers = #tpu.dot_dimension_numbers<[1], [0], [0], [1], [0, 0, 1, 1], [], []>} : vector<16x4xf32>, vector<4x512xf32>, vector<16x512xf32> -> vector<16x512xf32>
    %c0_43 = arith.constant 0 : index
    %c0_44 = arith.constant 0 : index
    %117 = vector.load %arg8[%c0_43, %c0_44] : memref<16x1xf32, #tpu.memory_space<vmem>>, vector<16x1xf32>
    %c0_45 = arith.constant 0 : index
    %c0_46 = arith.constant 0 : index
    %118 = vector.load %arg9[%c0_45, %c0_46] : memref<16x1xf32, #tpu.memory_space<vmem>>, vector<16x1xf32>
    %cst_47 = arith.constant dense<0.000000e+00> : vector<16xf32>
    %119 = vector.multi_reduction <add>, %116, %cst_47 [1] : vector<16x512xf32> to vector<16xf32>
    %120 = vector.shape_cast %119 : vector<16xf32> to vector<16x1xf32>
    %121 = arith.mulf %116, %116 : vector<16x512xf32>
    %cst_48 = arith.constant dense<0.000000e+00> : vector<16xf32>
    %122 = vector.multi_reduction <add>, %121, %cst_48 [1] : vector<16x512xf32> to vector<16xf32>
    %123 = vector.shape_cast %122 : vector<16xf32> to vector<16x1xf32>
    %cst_49 = arith.constant 0.001953125 : f32
    %124 = vector.broadcast %cst_49 : f32 to vector<16x1xf32>
    %125 = arith.mulf %120, %124 : vector<16x1xf32>
    %cst_50 = arith.constant 0.001953125 : f32
    %126 = vector.broadcast %cst_50 : f32 to vector<16x1xf32>
    %127 = arith.mulf %123, %126 : vector<16x1xf32>
    %128 = arith.mulf %125, %125 : vector<16x1xf32>
    %129 = arith.subf %127, %128 : vector<16x1xf32>
    %cst_51 = arith.constant 9.99999974E-6 : f32
    %130 = vector.broadcast %cst_51 : f32 to vector<16x1xf32>
    %131 = arith.addf %129, %130 : vector<16x1xf32>
    %132 = math.rsqrt %131 : vector<16x1xf32>
    %133 = arith.mulf %117, %132 : vector<16x1xf32>
    %134 = arith.mulf %125, %133 : vector<16x1xf32>
    %135 = arith.subf %118, %134 : vector<16x1xf32>
    %136 = vector.broadcast %133 : vector<16x1xf32> to vector<16x512xf32>
    %137 = arith.mulf %116, %136 : vector<16x512xf32>
    %138 = vector.broadcast %135 : vector<16x1xf32> to vector<16x512xf32>
    %139 = arith.addf %137, %138 : vector<16x512xf32>
    %c0_52 = arith.constant 0 : index
    %c0_53 = arith.constant 0 : index
    %140 = vector.load %arg0[%c0_52, %c0_53] : memref<16x512xf32, #tpu.memory_space<vmem>>, vector<16x512xf32>
    %141 = arith.addf %139, %140 : vector<16x512xf32>
    %cst_54 = arith.constant 0.000000e+00 : f32
    %142 = vector.broadcast %cst_54 : f32 to vector<16x512xf32>
    %143 = arith.maximumf %141, %142 : vector<16x512xf32>
    %c0_55 = arith.constant 0 : index
    %c0_56 = arith.constant 0 : index
    %144 = vector.load %arg10[%c0_55, %c0_56] : memref<16x512xf32, #tpu.memory_space<vmem>>, vector<16x512xf32>
    tpu.vector_store %arg10[%c0_55, %c0_56], %143 {strides = array<i32>} : memref<16x512xf32, #tpu.memory_space<vmem>>, vector<16x512xf32>,
    return
  }
}

</mosaic_0001>

<llo_original>
// kernel: bottleneck_forward.1
$region0: #{bottleneck_forward.1}
  #allocation0 [shape = 'u32[]', space=smem, size = 0x4, offset = 0x4, fixed_abs, tag = 'smem constant byte address 0x4 - core index']
  #allocation1 [shape = 'u32[144,128]{1,0:T(1,128)}', space=vmem, size = 0x12000, scoped, tag = 'internal scratch']
  %s0 = inlined_call_operand.vmem [shape: f32[16,512], index: 0, kind: input, shape index: {}, may-alias: {0,10}]
  %s1 = inlined_call_operand.vmem [shape: f32[8,16], index: 1, kind: input, shape index: {}]
  %s2 = inlined_call_operand.vmem [shape: f32[8,1], index: 2, kind: input, shape index: {}]
  %s3 = inlined_call_operand.vmem [shape: f32[8,1], index: 3, kind: input, shape index: {}]
  %s4 = inlined_call_operand.vmem [shape: f32[4,72], index: 4, kind: input, shape index: {}]
  %s5 = inlined_call_operand.vmem [shape: f32[4,1], index: 5, kind: input, shape index: {}]
  %s6 = inlined_call_operand.vmem [shape: f32[4,1], index: 6, kind: input, shape index: {}]
  %s7 = inlined_call_operand.vmem [shape: f32[16,4], index: 7, kind: input, shape index: {}]
  %s8 = inlined_call_operand.vmem [shape: f32[16,1], index: 8, kind: input, shape index: {}]
  %s9 = inlined_call_operand.vmem [shape: f32[16,1], index: 9, kind: input, shape index: {}]
  %s10 = inlined_call_operand.vmem [shape: f32[16,512], index: 10, kind: output, shape index: {}, may-alias: {0,10}]
  %s11 = sld [smem:[#allocation0]]
  $region50: #{bottleneck_forward.1} parent=0
    _
  %s13 = ssub.s32 1, %s11
  %s14 = scalar_select 0, %s13, %s11
  // Predicated region
  $region2: #{bottleneck_forward.1} parent=0 // pred_check
    _
  $region3: #{bottleneck_forward.1} parent=0 // pred_check_branch
    %16 = sbr.rel (0) target = $region5
  $region4: #{bottleneck_forward.1} parent=0 // pred_region
    _
  $region5: #{bottleneck_forward.1} parent=0 // pred_fallthru
    _
  // Predicated region
  $region6: #{bottleneck_forward.1} parent=0 // pred_check
    _
  $region7: #{bottleneck_forward.1} parent=0 // pred_check_branch
    %18 = sbr.rel (0) target = $region9
  $region8: #{bottleneck_forward.1} parent=0 // pred_region
    _
  $region9: #{bottleneck_forward.1} parent=0 // pred_fallthru
    _
  // Predicated region
  $region10: #{bottleneck_forward.1} parent=0 // pred_check
    _
  $region11: #{bottleneck_forward.1} parent=0 // pred_check_branch
    %20 = sbr.rel (0) target = $region13
  $region12: #{bottleneck_forward.1} parent=0 // pred_region
    _
  $region13: #{bottleneck_forward.1} parent=0 // pred_fallthru
    _
  // Predicated region
  $region14: #{bottleneck_forward.1} parent=0 // pred_check
    _
  $region15: #{bottleneck_forward.1} parent=0 // pred_check_branch
    %22 = sbr.rel (0) target = $region17
  $region16: #{bottleneck_forward.1} parent=0 // pred_region
    _
  $region17: #{bottleneck_forward.1} parent=0 // pred_fallthru
    _
  // Predicated region
  $region18: #{bottleneck_forward.1} parent=0 // pred_check
    _
  $region19: #{bottleneck_forward.1} parent=0 // pred_check_branch
    %24 = sbr.rel (0) target = $region21
  $region20: #{bottleneck_forward.1} parent=0 // pred_region
    _
  $region21: #{bottleneck_forward.1} parent=0 // pred_fallthru
    _
  // Predicated region
  $region22: #{bottleneck_forward.1} parent=0 // pred_check
    _
  $region23: #{bottleneck_forward.1} parent=0 // pred_check_branch
    %26 = sbr.rel (0) target = $region25
  $region24: #{bottleneck_forward.1} parent=0 // pred_region
    _
  $region25: #{bottleneck_forward.1} parent=0 // pred_fallthru
    _
  // Predicated region
  $region26: #{bottleneck_forward.1} parent=0 // pred_check
    _
  $region27: #{bottleneck_forward.1} parent=0 // pred_check_branch
    %28 = sbr.rel (0) target = $region29
  $region28: #{bottleneck_forward.1} parent=0 // pred_region
    _
  $region29: #{bottleneck_forward.1} parent=0 // pred_fallthru
    _
  // Predicated region
  $region30: #{bottleneck_forward.1} parent=0 // pred_check
    _
  $region31: #{bottleneck_forward.1} parent=0 // pred_check_branch
    %30 = sbr.rel (0) target = $region33
  $region32: #{bottleneck_forward.1} parent=0 // pred_region
    _
  $region33: #{bottleneck_forward.1} parent=0 // pred_fallthru
    _
  // Predicated region
  $region34: #{bottleneck_forward.1} parent=0 // pred_check
    _
  $region35: #{bottleneck_forward.1} parent=0 // pred_check_branch
    %32 = sbr.rel (0) target = $region37
  $region36: #{bottleneck_forward.1} parent=0 // pred_region
    _
  $region37: #{bottleneck_forward.1} parent=0 // pred_fallthru
    _
  // Predicated region
  $region38: #{bottleneck_forward.1} parent=0 // pred_check
    _
  $region39: #{bottleneck_forward.1} parent=0 // pred_check_branch
    %34 = sbr.rel (0) target = $region41
  $region40: #{bottleneck_forward.1} parent=0 // pred_region
    _
  $region41: #{bottleneck_forward.1} parent=0 // pred_fallthru
    _
  %v35 = vld [vmem:[%s1] sm:$0xff]
  %v36 = vld [vmem:[%s0] sm:$0xff]
  %v37 = vld [vmem:[%s0 + $0x8] sm:$0xff]
  %v38 = vld [vmem:[%s0 + $0x10] sm:$0xff]
  %v39 = vld [vmem:[%s0 + $0x18] sm:$0xff]
  %v40 = vld [vmem:[%s0 + $0x20] sm:$0xff]
  %v41 = vld [vmem:[%s0 + $0x28] sm:$0xff]
  %v42 = vld [vmem:[%s0 + $0x30] sm:$0xff]
  %v43 = vld [vmem:[%s0 + $0x38] sm:$0xff]
  %vm44 = vcmask 130048
  %v46 = vsel %vm44, %v35, 0
  %48 = vmatprep.subr.mxu0 0.0
  %49 = vmatpush1.msra.mxu0 0.0
  %50 = vmatprep.subr.mxu0 0.0
  %51 = vmatpush1.msra.mxu0 0.0
  %52 = vmatprep.subr.mxu0 0.0
  %53 = vmatpush1.msra.mxu0 0.0
  %54 = vmatprep.subr.mxu0 0.0
  %55 = vmatpush1.msra.mxu0 0.0
  %56 = vmatprep.subr.mxu0 0.0
  %57 = vmatpush1.msra.mxu0 0.0
  %58 = vmatprep.subr.mxu0 0.0
  %59 = vmatpush1.msra.mxu0 0.0
  %60 = vmatprep.subr.mxu0 0.0
  %61 = vmatpush1.msra.mxu0 0.0
  %62 = vmatprep.subr.mxu0 0.0
  %63 = vmatpush1.msra.mxu0 0.0
  %64 = vmatprep.subr.mxu0 0.0
  %65 = vmatpush1.msra.mxu0 0.0
  %66 = vmatprep.subr.mxu0 0.0
  %67 = vmatpush1.msra.mxu0 0.0
  %68 = vmatprep.subr.mxu0 0.0
  %69 = vmatpush1.msra.mxu0 0.0
  %70 = vmatprep.subr.mxu0 0.0
  %71 = vmatpush1.msra.mxu0 0.0
  %72 = vmatprep.subr.mxu0 0.0
  %73 = vmatpush1.msra.mxu0 0.0
  %74 = vmatprep.subr.mxu0 0.0
  %75 = vmatpush1.msra.mxu0 0.0
  %76 = vmatprep.subr.mxu0 %v41
  %77 = vmatpush1.msra.mxu0 %v40
  %78 = vmatprep.subr.mxu0 %v37
  %79 = vmatpush1.msra.mxu0 %v36
  %80 = vmatprep.subr.mxu0 0.0
  %81 = vmatpush2.msra.mxu0 0.0
  %82 = vmatprep.subr.mxu0 0.0
  %83 = vmatpush2.msra.mxu0 0.0
  %84 = vmatprep.subr.mxu0 0.0
  %85 = vmatpush2.msra.mxu0 0.0
  %86 = vmatprep.subr.mxu0 0.0
  %87 = vmatpush2.msra.mxu0 0.0
  %88 = vmatprep.subr.mxu0 0.0
  %89 = vmatpush2.msra.mxu0 0.0
  %90 = vmatprep.subr.mxu0 0.0
  %91 = vmatpush2.msra.mxu0 0.0
  %92 = vmatprep.subr.mxu0 0.0
  %93 = vmatpush2.msra.mxu0 0.0
  %94 = vmatprep.subr.mxu0 0.0
  %95 = vmatpush2.msra.mxu0 0.0
  %96 = vmatprep.subr.mxu0 0.0
  %97 = vmatpush2.msra.mxu0 0.0
  %98 = vmatprep.subr.mxu0 0.0
  %99 = vmatpush2.msra.mxu0 0.0
  %100 = vmatprep.subr.mxu0 0.0
  %101 = vmatpush2.msra.mxu0 0.0
  %102 = vmatprep.subr.mxu0 0.0
  %103 = vmatpush2.msra.mxu0 0.0
  %104 = vmatprep.subr.mxu0 0.0
  %105 = vmatpush2.msra.mxu0 0.0
  %106 = vmatprep.subr.mxu0 0.0
  %107 = vmatpush2.msra.mxu0 0.0
  %108 = vmatprep.subr.mxu0 0.0
  %109 = vmatpush2.msra.mxu0 0.0
  %110 = vmatprep.subr.mxu0 0.0
  %111 = vmatpush2.msra.mxu0 0.0
  %112 = vmatprep.mubr.f32.mxu0 0.0
  %113 = vmatmul.mubr.f32.gmra.mxu0 %v46
  %v114 = vpop.f32.mrf.mxu0
  %v115 = vadd.f32 0.0, %v114
  %v116 = vpop.f32.mrf.mxu0
  %v117 = vadd.f32 0.0, %v116
  %118 = vdwg.mxu0
  %119 = vmatprep.subr.mxu0 0.0
  %120 = vmatpush1.msra.mxu0 0.0
  %121 = vmatprep.subr.mxu0 0.0
  %122 = vmatpush1.msra.mxu0 0.0
  %123 = vmatprep.subr.mxu0 0.0
  %124 = vmatpush1.msra.mxu0 0.0
  %125 = vmatprep.subr.mxu0 0.0
  %126 = vmatpush1.msra.mxu0 0.0
  %127 = vmatprep.subr.mxu0 0.0
  %128 = vmatpush1.msra.mxu0 0.0
  %129 = vmatprep.subr.mxu0 0.0
  %130 = vmatpush1.msra.mxu0 0.0
  %131 = vmatprep.subr.mxu0 0.0
  %132 = vmatpush1.msra.mxu0 0.0
  %133 = vmatprep.subr.mxu0 0.0
  %134 = vmatpush1.msra.mxu0 0.0
  %135 = vmatprep.subr.mxu0 0.0
  %136 = vmatpush1.msra.mxu0 0.0
  %137 = vmatprep.subr.mxu0 0.0
  %138 = vmatpush1.msra.mxu0 0.0
  %139 = vmatprep.subr.mxu0 0.0
  %140 = vmatpush1.msra.mxu0 0.0
  %141 = vmatprep.subr.mxu0 0.0
  %142 = vmatpush1.msra.mxu0 0.0
  %143 = vmatprep.subr.mxu0 0.0
  %144 = vmatpush1.msra.mxu0 0.0
  %145 = vmatprep.subr.mxu0 0.0
  %146 = vmatpush1.msra.mxu0 0.0
  %147 = vmatprep.subr.mxu0 %v43
  %148 = vmatpush1.msra.mxu0 %v42
  %149 = vmatprep.subr.mxu0 %v39
  %150 = vmatpush1.msra.mxu0 %v38
  %151 = vmatprep.subr.mxu0 0.0
  %152 = vmatpush2.msra.mxu0 0.0
  %153 = vmatprep.subr.mxu0 0.0
  %154 = vmatpush2.msra.mxu0 0.0
  %155 = vmatprep.subr.mxu0 0.0
  %156 = vmatpush2.msra.mxu0 0.0
  %157 = vmatprep.subr.mxu0 0.0
  %158 = vmatpush2.msra.mxu0 0.0
  %159 = vmatprep.subr.mxu0 0.0
  %160 = vmatpush2.msra.mxu0 0.0
  %161 = vmatprep.subr.mxu0 0.0
  %162 = vmatpush2.msra.mxu0 0.0
  %163 = vmatprep.subr.mxu0 0.0
  %164 = vmatpush2.msra.mxu0 0.0
  %165 = vmatprep.subr.mxu0 0.0
  %166 = vmatpush2.msra.mxu0 0.0
  %167 = vmatprep.subr.mxu0 0.0
  %168 = vmatpush2.msra.mxu0 0.0
  %169 = vmatprep.subr.mxu0 0.0
  %170 = vmatpush2.msra.mxu0 0.0
  %171 = vmatprep.subr.mxu0 0.0
  %172 = vmatpush2.msra.mxu0 0.0
  %173 = vmatprep.subr.mxu0 0.0
  %174 = vmatpush2.msra.mxu0 0.0
  %175 = vmatprep.subr.mxu0 0.0
  %176 = vmatpush2.msra.mxu0 0.0
  %177 = vmatprep.subr.mxu0 0.0
  %178 = vmatpush2.msra.mxu0 0.0
  %179 = vmatprep.subr.mxu0 0.0
  %180 = vmatpush2.msra.mxu0 0.0
  %181 = vmatprep.subr.mxu0 0.0
  %182 = vmatpush2.msra.mxu0 0.0
  %183 = vmatprep.mubr.f32.mxu0 0.0
  %184 = vmatmul.mubr.f32.gmra.mxu0 %v46
  %v185 = vpop.f32.mrf.mxu0
  %v186 = vadd.f32 0.0, %v185
  %v187 = vpop.f32.mrf.mxu0
  %v188 = vadd.f32 0.0, %v187
  %189 = vdwg.mxu0
  %v190 = vld [vmem:[%s2] sm:$0xff]
  %v191 = vld [vmem:[%s3] sm:$0xff]
  %v192 = vadd.f32 %v115, %v117
  %v193 = vadd.f32 %v192, %v186
  %v194 = vadd.f32 %v193, %v188
  %195 = vadd.xlane.f32.xlu0 %v194
  %v196 = vpop.xlane.xlu0 %195
  %v197 = vmul.f32 %v115, %v115
  %v198 = vmul.f32 %v117, %v117
  %v199 = vmul.f32 %v186, %v186
  %v200 = vmul.f32 %v188, %v188
  %v201 = vadd.f32 %v197, %v198
  %v202 = vadd.f32 %v201, %v199
  %v203 = vadd.f32 %v202, %v200
  %204 = vadd.xlane.f32.xlu0 %v203
  %v205 = vpop.xlane.xlu0 %204
  %v206 = vmul.f32 %v196, 0.001953125
  %v207 = vmul.f32 %v205, 0.001953125
  %v208 = vmul.f32 %v206, %v206
  %v209 = vsub.f32 %v207, %v208
  %v210 = vadd.f32 %v209, 1e-05
  %v211 = vrsqrt.pop %v210
  %v212 = vmul.f32 %v190, %v211
  %v213 = vmul.f32 %v206, %v212
  %v214 = vsub.f32 %v191, %v213
  %216 = vset.pattern.permute.xlu0 0
  %217 = vperm.xlu0 %216, %v212
  %v218 = vpop.permute.xlu0 %217
  %v220 = vmul.f32 %v115, %v218
  %v221 = vmul.f32 %v117, %v218
  %v222 = vmul.f32 %v186, %v218
  %v223 = vmul.f32 %v188, %v218
  %225 = vset.pattern.permute.xlu0 0
  %226 = vperm.xlu0 %225, %v214
  %v227 = vpop.permute.xlu0 %226
  %v229 = vadd.f32 %v220, %v227
  %v230 = vadd.f32 %v221, %v227
  %v231 = vadd.f32 %v222, %v227
  %v232 = vadd.f32 %v223, %v227
  %v233 = vmax.f32 %v229, 0.0
  %v234 = vmax.f32 %v230, 0.0
  %v235 = vmax.f32 %v231, 0.0
  %v236 = vmax.f32 %v232, 0.0
  %v237 = vlaneseq
  %v238 = vand.u32 %v237, 127
  %v239 = vadd.s32 %v238, 128
  %v240 = vadd.s32 %v238, 256
  %v241 = vadd.s32 %v238, 384
  %v242 = vand.u32 %v238, 15
  %v243 = vand.u32 %v239, 15
  %v244 = vand.u32 %v240, 15
  %v245 = vand.u32 %v241, 15
  %v246 = vshra.s32 %v238, 4
  %v247 = vshra.s32 %v239, 4
  %v248 = vshra.s32 %v240, 4
  %v249 = vshra.s32 %v241, 4
  %v250 = vand.u32 %v246, 15
  %v251 = vand.u32 %v247, 15
  %v252 = vand.u32 %v248, 15
  %v253 = vand.u32 %v249, 15
  %vm254 = vcmp.ge.s32.totalorder %v250, 1
  %vm255 = vcmp.ge.s32.totalorder %v251, 1
  %vm256 = vcmp.ge.s32.totalorder %v252, 1
  %vm257 = vcmp.ge.s32.totalorder %v253, 1
  %vm258 = vcmp.lt.s32.totalorder %v250, 15
  %vm259 = vcmp.lt.s32.totalorder %v251, 15
  %vm260 = vcmp.lt.s32.totalorder %v252, 15
  %vm261 = vcmp.lt.s32.totalorder %v253, 15
  %vm262 = vcmp.ge.s32.totalorder %v242, 1
  %vm263 = vcmp.ge.s32.totalorder %v243, 1
  %vm264 = vcmp.ge.s32.totalorder %v244, 1
  %vm265 = vcmp.ge.s32.totalorder %v245, 1
  %vm266 = vcmp.lt.s32.totalorder %v242, 15
  %vm267 = vcmp.lt.s32.totalorder %v243, 15
  %vm268 = vcmp.lt.s32.totalorder %v244, 15
  %vm269 = vcmp.lt.s32.totalorder %v245, 15
  %270 = vrot.lane.b32.xlu0 %v233, 17
  %v271 = vpop.permute.xlu0 %270
  %272 = vrot.lane.b32.xlu0 %v234, 17
  %v273 = vpop.permute.xlu0 %272
  %274 = vrot.lane.b32.xlu0 %v235, 17
  %v275 = vpop.permute.xlu0 %274
  %276 = vrot.lane.b32.xlu0 %v236, 17
  %v277 = vpop.permute.xlu0 %276
  %vm278 = vcmp.lt.s32.totalorder %v238, 17
  %v279 = vsel %vm278, %v275, %v277
  %v280 = vsel %vm278, %v273, %v275
  %v281 = vsel %vm278, %v271, %v273
  %v282 = vsel %vm278, %v277, %v271
  %vm283 = vmand %vm254, %vm262
  %vm284 = vmand %vm255, %vm263
  %vm285 = vmand %vm256, %vm264
  %vm286 = vmand %vm257, %vm265
  %v287 = vsel %vm283, 1, 0
  %v288 = vsel %vm284, 1, 0
  %v289 = vsel %vm285, 1, 0
  %v290 = vsel %vm286, 1, 0
  %vm291 = vcmp.eq.s32.totalorder %v287, 1
  %vm292 = vcmp.eq.s32.totalorder %v288, 1
  %vm293 = vcmp.eq.s32.totalorder %v289, 1
  %vm294 = vcmp.eq.s32.totalorder %v290, 1
  %v295 = vsel %vm291, %v282, 0.0
  %v296 = vsel %vm292, %v281, 0.0
  %v297 = vsel %vm293, %v280, 0.0
  %v298 = vsel %vm294, %v279, 0.0
  %299 = vrot.lane.b32.xlu0 %v233, 16
  %v300 = vpop.permute.xlu0 %299
  %301 = vrot.lane.b32.xlu0 %v234, 16
  %v302 = vpop.permute.xlu0 %301
  %303 = vrot.lane.b32.xlu0 %v235, 16
  %v304 = vpop.permute.xlu0 %303
  %305 = vrot.lane.b32.xlu0 %v236, 16
  %v306 = vpop.permute.xlu0 %305
  %vm307 = vcmp.lt.s32.totalorder %v238, 16
  %v308 = vsel %vm307, %v304, %v306
  %v309 = vsel %vm307, %v302, %v304
  %v310 = vsel %vm307, %v300, %v302
  %v311 = vsel %vm307, %v306, %v300
  %v312 = vsel %vm254, 1, 0
  %v313 = vsel %vm255, 1, 0
  %v314 = vsel %vm256, 1, 0
  %v315 = vsel %vm257, 1, 0
  %vm316 = vcmp.eq.s32.totalorder %v312, 1
  %vm317 = vcmp.eq.s32.totalorder %v313, 1
  %vm318 = vcmp.eq.s32.totalorder %v314, 1
  %vm319 = vcmp.eq.s32.totalorder %v315, 1
  %v320 = vsel %vm316, %v311, 0.0
  %v321 = vsel %vm317, %v310, 0.0
  %v322 = vsel %vm318, %v309, 0.0
  %v323 = vsel %vm319, %v308, 0.0
  %324 = vrot.lane.b32.xlu0 %v233, 15
  %v325 = vpop.permute.xlu0 %324
  %326 = vrot.lane.b32.xlu0 %v234, 15
  %v327 = vpop.permute.xlu0 %326
  %328 = vrot.lane.b32.xlu0 %v235, 15
  %v329 = vpop.permute.xlu0 %328
  %330 = vrot.lane.b32.xlu0 %v236, 15
  %v331 = vpop.permute.xlu0 %330
  %vm332 = vcmp.lt.s32.totalorder %v238, 15
  %v333 = vsel %vm332, %v329, %v331
  %v334 = vsel %vm332, %v327, %v329
  %v335 = vsel %vm332, %v325, %v327
  %v336 = vsel %vm332, %v331, %v325
  %vm337 = vmand %vm254, %vm266
  %vm338 = vmand %vm255, %vm267
  %vm339 = vmand %vm256, %vm268
  %vm340 = vmand %vm257, %vm269
  %v341 = vsel %vm337, 1, 0
  %v342 = vsel %vm338, 1, 0
  %v343 = vsel %vm339, 1, 0
  %v344 = vsel %vm340, 1, 0
  %vm345 = vcmp.eq.s32.totalorder %v341, 1
  %vm346 = vcmp.eq.s32.totalorder %v342, 1
  %vm347 = vcmp.eq.s32.totalorder %v343, 1
  %vm348 = vcmp.eq.s32.totalorder %v344, 1
  %v349 = vsel %vm345, %v336, 0.0
  %v350 = vsel %vm346, %v335, 0.0
  %v351 = vsel %vm347, %v334, 0.0
  %v352 = vsel %vm348, %v333, 0.0
  %353 = vrot.lane.b32.xlu0 %v233, 1
  %v354 = vpop.permute.xlu0 %353
  %355 = vrot.lane.b32.xlu0 %v234, 1
  %v356 = vpop.permute.xlu0 %355
  %357 = vrot.lane.b32.xlu0 %v235, 1
  %v358 = vpop.permute.xlu0 %357
  %359 = vrot.lane.b32.xlu0 %v236, 1
  %v360 = vpop.permute.xlu0 %359
  %vm361 = vcmp.lt.s32.totalorder %v238, 1
  %v362 = vsel %vm361, %v358, %v360
  %v363 = vsel %vm361, %v356, %v358
  %v364 = vsel %vm361, %v354, %v356
  %v365 = vsel %vm361, %v360, %v354
  %v366 = vsel %vm262, 1, 0
  %v367 = vsel %vm263, 1, 0
  %v368 = vsel %vm264, 1, 0
  %v369 = vsel %vm265, 1, 0
  %vm370 = vcmp.eq.s32.totalorder %v366, 1
  %vm371 = vcmp.eq.s32.totalorder %v367, 1
  %vm372 = vcmp.eq.s32.totalorder %v368, 1
  %vm373 = vcmp.eq.s32.totalorder %v369, 1
  %v374 = vsel %vm370, %v365, 0.0
  %v375 = vsel %vm371, %v364, 0.0
  %v376 = vsel %vm372, %v363, 0.0
  %v377 = vsel %vm373, %v362, 0.0
  %378 = vrot.lane.b32.xlu0 %v233, 127
  %v379 = vpop.permute.xlu0 %378
  %380 = vrot.lane.b32.xlu0 %v234, 127
  %v381 = vpop.permute.xlu0 %380
  %382 = vrot.lane.b32.xlu0 %v235, 127
  %v383 = vpop.permute.xlu0 %382
  %384 = vrot.lane.b32.xlu0 %v236, 127
  %v385 = vpop.permute.xlu0 %384
  %vm386 = vcmp.lt.s32.totalorder %v238, 127
  %v387 = vsel %vm386, %v383, %v385
  %v388 = vsel %vm386, %v381, %v383
  %v389 = vsel %vm386, %v379, %v381
  %v390 = vsel %vm386, %v385, %v379
  %v391 = vsel %vm266, 1, 0
  %v392 = vsel %vm267, 1, 0
  %v393 = vsel %vm268, 1, 0
  %v394 = vsel %vm269, 1, 0
  %vm395 = vcmp.eq.s32.totalorder %v391, 1
  %vm396 = vcmp.eq.s32.totalorder %v392, 1
  %vm397 = vcmp.eq.s32.totalorder %v393, 1
  %vm398 = vcmp.eq.s32.totalorder %v394, 1
  %v399 = vsel %vm395, %v389, 0.0
  %v400 = vsel %vm396, %v388, 0.0
  %v401 = vsel %vm397, %v387, 0.0
  %v402 = vsel %vm398, %v390, 0.0
  %403 = vrot.lane.b32.xlu0 %v233, 113
  %v404 = vpop.permute.xlu0 %403
  %405 = vrot.lane.b32.xlu0 %v234, 113
  %v406 = vpop.permute.xlu0 %405
  %407 = vrot.lane.b32.xlu0 %v235, 113
  %v408 = vpop.permute.xlu0 %407
  %409 = vrot.lane.b32.xlu0 %v236, 113
  %v410 = vpop.permute.xlu0 %409
  %vm411 = vcmp.lt.s32.totalorder %v238, 113
  %v412 = vsel %vm411, %v408, %v410
  %v413 = vsel %vm411, %v406, %v408
  %v414 = vsel %vm411, %v404, %v406
  %v415 = vsel %vm411, %v410, %v404
  %vm416 = vmand %vm258, %vm262
  %vm417 = vmand %vm259, %vm263
  %vm418 = vmand %vm260, %vm264
  %vm419 = vmand %vm261, %vm265
  %v420 = vsel %vm416, 1, 0
  %v421 = vsel %vm417, 1, 0
  %v422 = vsel %vm418, 1, 0
  %v423 = vsel %vm419, 1, 0
  %vm424 = vcmp.eq.s32.totalorder %v420, 1
  %vm425 = vcmp.eq.s32.totalorder %v421, 1
  %vm426 = vcmp.eq.s32.totalorder %v422, 1
  %vm427 = vcmp.eq.s32.totalorder %v423, 1
  %v428 = vsel %vm424, %v414, 0.0
  %v429 = vsel %vm425, %v413, 0.0
  %v430 = vsel %vm426, %v412, 0.0
  %v431 = vsel %vm427, %v415, 0.0
  %432 = vrot.lane.b32.xlu0 %v233, 112
  %v433 = vpop.permute.xlu0 %432
  %434 = vrot.lane.b32.xlu0 %v234, 112
  %v435 = vpop.permute.xlu0 %434
  %436 = vrot.lane.b32.xlu0 %v235, 112
  %v437 = vpop.permute.xlu0 %436
  %438 = vrot.lane.b32.xlu0 %v236, 112
  %v439 = vpop.permute.xlu0 %438
  %vm440 = vcmp.lt.s32.totalorder %v238, 112
  %v441 = vsel %vm440, %v437, %v439
  %v442 = vsel %vm440, %v435, %v437
  %v443 = vsel %vm440, %v433, %v435
  %v444 = vsel %vm440, %v439, %v433
  %v445 = vsel %vm258, 1, 0
  %v446 = vsel %vm259, 1, 0
  %v447 = vsel %vm260, 1, 0
  %v448 = vsel %vm261, 1, 0
  %vm449 = vcmp.eq.s32.totalorder %v445, 1
  %vm450 = vcmp.eq.s32.totalorder %v446, 1
  %vm451 = vcmp.eq.s32.totalorder %v447, 1
  %vm452 = vcmp.eq.s32.totalorder %v448, 1
  %v453 = vsel %vm449, %v443, 0.0
  %v454 = vsel %vm450, %v442, 0.0
  %v455 = vsel %vm451, %v441, 0.0
  %v456 = vsel %vm452, %v444, 0.0
  %457 = vrot.lane.b32.xlu0 %v233, 111
  %v458 = vpop.permute.xlu0 %457
  %459 = vrot.lane.b32.xlu0 %v234, 111
  %v460 = vpop.permute.xlu0 %459
  %461 = vrot.lane.b32.xlu0 %v235, 111
  %v462 = vpop.permute.xlu0 %461
  %463 = vrot.lane.b32.xlu0 %v236, 111
  %v464 = vpop.permute.xlu0 %463
  %vm465 = vcmp.lt.s32.totalorder %v238, 111
  %v466 = vsel %vm465, %v462, %v464
  %v467 = vsel %vm465, %v460, %v462
  %v468 = vsel %vm465, %v458, %v460
  %v469 = vsel %vm465, %v464, %v458
  %vm470 = vmand %vm258, %vm266
  %vm471 = vmand %vm259, %vm267
  %vm472 = vmand %vm260, %vm268
  %vm473 = vmand %vm261, %vm269
  %v474 = vsel %vm470, 1, 0
  %v475 = vsel %vm471, 1, 0
  %v476 = vsel %vm472, 1, 0
  %v477 = vsel %vm473, 1, 0
  %vm478 = vcmp.eq.s32.totalorder %v474, 1
  %vm479 = vcmp.eq.s32.totalorder %v475, 1
  %vm480 = vcmp.eq.s32.totalorder %v476, 1
  %vm481 = vcmp.eq.s32.totalorder %v477, 1
  %v482 = vsel %vm478, %v468, 0.0
  %v483 = vsel %vm479, %v467, 0.0
  %v484 = vsel %vm480, %v466, 0.0
  %v485 = vsel %vm481, %v469, 0.0
  %v486 = vld [vmem:[%s4] sm:$0xf]
  %vm487 = vcmask 588800
  %v489 = vsel %vm487, %v486, 0
  %491 = vmatprep.subr.mxu0 0.0
  %492 = vmatpush1.msra.mxu0 0.0
  %493 = vmatprep.subr.mxu0 0.0
  %494 = vmatpush1.msra.mxu0 0.0
  %495 = vmatprep.subr.mxu0 0.0
  %496 = vmatpush1.msra.mxu0 0.0
  %497 = vmatprep.subr.mxu0 0.0
  %498 = vmatpush1.msra.mxu0 0.0
  %499 = vmatprep.subr.mxu0 0.0
  %500 = vmatpush1.msra.mxu0 0.0
  %501 = vmatprep.subr.mxu0 0.0
  %502 = vmatpush1.msra.mxu0 0.0
  %503 = vmatprep.subr.mxu0 0.0
  %504 = vmatpush1.msra.mxu0 0.0
  %505 = vmatprep.subr.mxu0 %v483
  %506 = vmatpush1.msra.mxu0 %v482
  %507 = vmatprep.subr.mxu0 %v454
  %508 = vmatpush1.msra.mxu0 %v453
  %509 = vmatprep.subr.mxu0 %v429
  %510 = vmatpush1.msra.mxu0 %v428
  %511 = vmatprep.subr.mxu0 %v400
  %512 = vmatpush1.msra.mxu0 %v399
  %513 = vmatprep.subr.mxu0 %v234
  %514 = vmatpush1.msra.mxu0 %v233
  %515 = vmatprep.subr.mxu0 %v375
  %516 = vmatpush1.msra.mxu0 %v374
  %517 = vmatprep.subr.mxu0 %v350
  %518 = vmatpush1.msra.mxu0 %v349
  %519 = vmatprep.subr.mxu0 %v321
  %520 = vmatpush1.msra.mxu0 %v320
  %521 = vmatprep.subr.mxu0 %v296
  %522 = vmatpush1.msra.mxu0 %v295
  %523 = vmatprep.subr.mxu0 0.0
  %524 = vmatpush2.msra.mxu0 0.0
  %525 = vmatprep.subr.mxu0 0.0
  %526 = vmatpush2.msra.mxu0 0.0
  %527 = vmatprep.subr.mxu0 0.0
  %528 = vmatpush2.msra.mxu0 0.0
  %529 = vmatprep.subr.mxu0 0.0
  %530 = vmatpush2.msra.mxu0 0.0
  %531 = vmatprep.subr.mxu0 0.0
  %532 = vmatpush2.msra.mxu0 0.0
  %533 = vmatprep.subr.mxu0 0.0
  %534 = vmatpush2.msra.mxu0 0.0
  %535 = vmatprep.subr.mxu0 0.0
  %536 = vmatpush2.msra.mxu0 0.0
  %537 = vmatprep.subr.mxu0 0.0
  %538 = vmatpush2.msra.mxu0 0.0
  %539 = vmatprep.subr.mxu0 0.0
  %540 = vmatpush2.msra.mxu0 0.0
  %541 = vmatprep.subr.mxu0 0.0
  %542 = vmatpush2.msra.mxu0 0.0
  %543 = vmatprep.subr.mxu0 0.0
  %544 = vmatpush2.msra.mxu0 0.0
  %545 = vmatprep.subr.mxu0 0.0
  %546 = vmatpush2.msra.mxu0 0.0
  %547 = vmatprep.subr.mxu0 0.0
  %548 = vmatpush2.msra.mxu0 0.0
  %549 = vmatprep.subr.mxu0 0.0
  %550 = vmatpush2.msra.mxu0 0.0
  %551 = vmatprep.subr.mxu0 0.0
  %552 = vmatpush2.msra.mxu0 0.0
  %553 = vmatprep.subr.mxu0 0.0
  %554 = vmatpush2.msra.mxu0 0.0
  %555 = vmatprep.mubr.f32.mxu0 0.0
  %556 = vmatmul.mubr.f32.gmra.mxu0 %v489
  %v557 = vpop.f32.mrf.mxu0
  %v558 = vadd.f32 0.0, %v557
  %v559 = vpop.f32.mrf.mxu0
  %v560 = vadd.f32 0.0, %v559
  %561 = vdwg.mxu0
  %562 = vmatprep.subr.mxu0 0.0
  %563 = vmatpush1.msra.mxu0 0.0
  %564 = vmatprep.subr.mxu0 0.0
  %565 = vmatpush1.msra.mxu0 0.0
  %566 = vmatprep.subr.mxu0 0.0
  %567 = vmatpush1.msra.mxu0 0.0
  %568 = vmatprep.subr.mxu0 0.0
  %569 = vmatpush1.msra.mxu0 0.0
  %570 = vmatprep.subr.mxu0 0.0
  %571 = vmatpush1.msra.mxu0 0.0
  %572 = vmatprep.subr.mxu0 0.0
  %573 = vmatpush1.msra.mxu0 0.0
  %574 = vmatprep.subr.mxu0 0.0
  %575 = vmatpush1.msra.mxu0 0.0
  %576 = vmatprep.subr.mxu0 %v485
  %577 = vmatpush1.msra.mxu0 %v484
  %578 = vmatprep.subr.mxu0 %v456
  %579 = vmatpush1.msra.mxu0 %v455
  %580 = vmatprep.subr.mxu0 %v431
  %581 = vmatpush1.msra.mxu0 %v430
  %582 = vmatprep.subr.mxu0 %v402
  %583 = vmatpush1.msra.mxu0 %v401
  %584 = vmatprep.subr.mxu0 %v236
  %585 = vmatpush1.msra.mxu0 %v235
  %586 = vmatprep.subr.mxu0 %v377
  %587 = vmatpush1.msra.mxu0 %v376
  %588 = vmatprep.subr.mxu0 %v352
  %589 = vmatpush1.msra.mxu0 %v351
  %590 = vmatprep.subr.mxu0 %v323
  %591 = vmatpush1.msra.mxu0 %v322
  %592 = vmatprep.subr.mxu0 %v298
  %593 = vmatpush1.msra.mxu0 %v297
  %594 = vmatprep.subr.mxu0 0.0
  %595 = vmatpush2.msra.mxu0 0.0
  %596 = vmatprep.subr.mxu0 0.0
  %597 = vmatpush2.msra.mxu0 0.0
  %598 = vmatprep.subr.mxu0 0.0
  %599 = vmatpush2.msra.mxu0 0.0
  %600 = vmatprep.subr.mxu0 0.0
  %601 = vmatpush2.msra.mxu0 0.0
  %602 = vmatprep.subr.mxu0 0.0
  %603 = vmatpush2.msra.mxu0 0.0
  %604 = vmatprep.subr.mxu0 0.0
  %605 = vmatpush2.msra.mxu0 0.0
  %606 = vmatprep.subr.mxu0 0.0
  %607 = vmatpush2.msra.mxu0 0.0
  %608 = vmatprep.subr.mxu0 0.0
  %609 = vmatpush2.msra.mxu0 0.0
  %610 = vmatprep.subr.mxu0 0.0
  %611 = vmatpush2.msra.mxu0 0.0
  %612 = vmatprep.subr.mxu0 0.0
  %613 = vmatpush2.msra.mxu0 0.0
  %614 = vmatprep.subr.mxu0 0.0
  %615 = vmatpush2.msra.mxu0 0.0
  %616 = vmatprep.subr.mxu0 0.0
  %617 = vmatpush2.msra.mxu0 0.0
  %618 = vmatprep.subr.mxu0 0.0
  %619 = vmatpush2.msra.mxu0 0.0
  %620 = vmatprep.subr.mxu0 0.0
  %621 = vmatpush2.msra.mxu0 0.0
  %622 = vmatprep.subr.mxu0 0.0
  %623 = vmatpush2.msra.mxu0 0.0
  %624 = vmatprep.subr.mxu0 0.0
  %625 = vmatpush2.msra.mxu0 0.0
  %626 = vmatprep.mubr.f32.mxu0 0.0
  %627 = vmatmul.mubr.f32.gmra.mxu0 %v489
  %v628 = vpop.f32.mrf.mxu0
  %v629 = vadd.f32 0.0, %v628
  %v630 = vpop.f32.mrf.mxu0
  %v631 = vadd.f32 0.0, %v630
  %632 = vdwg.mxu0
  %v633 = vld [vmem:[%s5] sm:$0xf]
  %v634 = vld [vmem:[%s6] sm:$0xf]
  %vm635 = vcmask 1043456
  %v636 = vsel %vm635, %v558, 0.0
  %v637 = vsel %vm635, %v560, 0.0
  %v638 = vadd.f32 %v636, %v637
  %v639 = vsel %vm635, %v629, 0.0
  %v640 = vadd.f32 %v638, %v639
  %v641 = vsel %vm635, %v631, 0.0
  %v642 = vadd.f32 %v640, %v641
  %643 = vadd.xlane.f32.xlu0 %v642
  %v644 = vpop.xlane.xlu0 %643
  %v645 = vmul.f32 %v558, %v558
  %v646 = vmul.f32 %v560, %v560
  %v647 = vmul.f32 %v629, %v629
  %v648 = vmul.f32 %v631, %v631
  %v649 = vsel %vm635, %v645, 0.0
  %v650 = vsel %vm635, %v646, 0.0
  %v651 = vadd.f32 %v649, %v650
  %v652 = vsel %vm635, %v647, 0.0
  %v653 = vadd.f32 %v651, %v652
  %v654 = vsel %vm635, %v648, 0.0
  %v655 = vadd.f32 %v653, %v654
  %656 = vadd.xlane.f32.xlu0 %v655
  %v657 = vpop.xlane.xlu0 %656
  %v658 = vmul.f32 %v644, 0.001953125
  %v659 = vmul.f32 %v657, 0.001953125
  %v660 = vmul.f32 %v658, %v658
  %v661 = vsub.f32 %v659, %v660
  %v662 = vadd.f32 %v661, 1e-05
  %v663 = vrsqrt.pop %v662
  %v664 = vmul.f32 %v633, %v663
  %v665 = vmul.f32 %v658, %v664
  %v666 = vsub.f32 %v634, %v665
  %668 = vset.pattern.permute.xlu0 0
  %669 = vperm.xlu0 %668, %v664
  %v670 = vpop.permute.xlu0 %669
  %v672 = vmul.f32 %v558, %v670
  %v673 = vmul.f32 %v560, %v670
  %v674 = vmul.f32 %v629, %v670
  %v675 = vmul.f32 %v631, %v670
  %677 = vset.pattern.permute.xlu0 0
  %678 = vperm.xlu0 %677, %v666
  %v679 = vpop.permute.xlu0 %678
  %v681 = vadd.f32 %v672, %v679
  %v682 = vadd.f32 %v673, %v679
  %v683 = vadd.f32 %v674, %v679
  %v684 = vadd.f32 %v675, %v679
  %v685 = vmax.f32 %v681, 0.0
  %v686 = vmax.f32 %v682, 0.0
  %v687 = vmax.f32 %v683, 0.0
  %v688 = vmax.f32 %v684, 0.0
  %v689 = vld [vmem:[%s7] sm:$0xff]
  %v690 = vld [vmem:[%s7 + $0x8] sm:$0xff]
  %vm691 = vcmask 31744
  %v693 = vsel %vm691, %v689, 0
  %v696 = vsel %vm691, %v690, 0
  %v699 = vsel %vm635, %v685, 0
  %v702 = vsel %vm635, %v686, 0
  %v705 = vsel %vm635, %v687, 0
  %v708 = vsel %vm635, %v688, 0
  %710 = vmatprep.subr.mxu0 0.0
  %711 = vmatpush1.msra.mxu0 0.0
  %712 = vmatprep.subr.mxu0 0.0
  %713 = vmatpush1.msra.mxu0 0.0
  %714 = vmatprep.subr.mxu0 0.0
  %715 = vmatpush1.msra.mxu0 0.0
  %716 = vmatprep.subr.mxu0 0.0
  %717 = vmatpush1.msra.mxu0 0.0
  %718 = vmatprep.subr.mxu0 0.0
  %719 = vmatpush1.msra.mxu0 0.0
  %720 = vmatprep.subr.mxu0 0.0
  %721 = vmatpush1.msra.mxu0 0.0
  %722 = vmatprep.subr.mxu0 0.0
  %723 = vmatpush1.msra.mxu0 0.0
  %724 = vmatprep.subr.mxu0 0.0
  %725 = vmatpush1.msra.mxu0 0.0
  %726 = vmatprep.subr.mxu0 0.0
  %727 = vmatpush1.msra.mxu0 0.0
  %728 = vmatprep.subr.mxu0 0.0
  %729 = vmatpush1.msra.mxu0 0.0
  %730 = vmatprep.subr.mxu0 0.0
  %731 = vmatpush1.msra.mxu0 0.0
  %732 = vmatprep.subr.mxu0 0.0
  %733 = vmatpush1.msra.mxu0 0.0
  %734 = vmatprep.subr.mxu0 0.0
  %735 = vmatpush1.msra.mxu0 0.0
  %736 = vmatprep.subr.mxu0 0.0
  %737 = vmatpush1.msra.mxu0 0.0
  %738 = vmatprep.subr.mxu0 0.0
  %739 = vmatpush1.msra.mxu0 0.0
  %740 = vmatprep.subr.mxu0 %v702
  %741 = vmatpush1.msra.mxu0 %v699
  %742 = vmatprep.subr.mxu0 0.0
  %743 = vmatpush2.msra.mxu0 0.0
  %744 = vmatprep.subr.mxu0 0.0
  %745 = vmatpush2.msra.mxu0 0.0
  %746 = vmatprep.subr.mxu0 0.0
  %747 = vmatpush2.msra.mxu0 0.0
  %748 = vmatprep.subr.mxu0 0.0
  %749 = vmatpush2.msra.mxu0 0.0
  %750 = vmatprep.subr.mxu0 0.0
  %751 = vmatpush2.msra.mxu0 0.0
  %752 = vmatprep.subr.mxu0 0.0
  %753 = vmatpush2.msra.mxu0 0.0
  %754 = vmatprep.subr.mxu0 0.0
  %755 = vmatpush2.msra.mxu0 0.0
  %756 = vmatprep.subr.mxu0 0.0
  %757 = vmatpush2.msra.mxu0 0.0
  %758 = vmatprep.subr.mxu0 0.0
  %759 = vmatpush2.msra.mxu0 0.0
  %760 = vmatprep.subr.mxu0 0.0
  %761 = vmatpush2.msra.mxu0 0.0
  %762 = vmatprep.subr.mxu0 0.0
  %763 = vmatpush2.msra.mxu0 0.0
  %764 = vmatprep.subr.mxu0 0.0
  %765 = vmatpush2.msra.mxu0 0.0
  %766 = vmatprep.subr.mxu0 0.0
  %767 = vmatpush2.msra.mxu0 0.0
  %768 = vmatprep.subr.mxu0 0.0
  %769 = vmatpush2.msra.mxu0 0.0
  %770 = vmatprep.subr.mxu0 0.0
  %771 = vmatpush2.msra.mxu0 0.0
  %772 = vmatprep.subr.mxu0 0.0
  %773 = vmatpush2.msra.mxu0 0.0
  %774 = vmatprep.mubr.f32.mxu0 0.0
  %775 = vmatmul.mubr.f32.gmra.mxu0 %v693
  %v776 = vpop.f32.mrf.mxu0
  %v777 = vadd.f32 0.0, %v776
  %v778 = vpop.f32.mrf.mxu0
  %v779 = vadd.f32 0.0, %v778
  %780 = vmatprep.mubr.f32.mxu0 0.0
  %781 = vmatmul.mubr.f32.gmra.mxu0 %v696
  %v782 = vpop.f32.mrf.mxu0
  %v783 = vadd.f32 0.0, %v782
  %v784 = vpop.f32.mrf.mxu0
  %v785 = vadd.f32 0.0, %v784
  %786 = vdwg.mxu0
  %787 = vmatprep.subr.mxu0 0.0
  %788 = vmatpush1.msra.mxu0 0.0
  %789 = vmatprep.subr.mxu0 0.0
  %790 = vmatpush1.msra.mxu0 0.0
  %791 = vmatprep.subr.mxu0 0.0
  %792 = vmatpush1.msra.mxu0 0.0
  %793 = vmatprep.subr.mxu0 0.0
  %794 = vmatpush1.msra.mxu0 0.0
  %795 = vmatprep.subr.mxu0 0.0
  %796 = vmatpush1.msra.mxu0 0.0
  %797 = vmatprep.subr.mxu0 0.0
  %798 = vmatpush1.msra.mxu0 0.0
  %799 = vmatprep.subr.mxu0 0.0
  %800 = vmatpush1.msra.mxu0 0.0
  %801 = vmatprep.subr.mxu0 0.0
  %802 = vmatpush1.msra.mxu0 0.0
  %803 = vmatprep.subr.mxu0 0.0
  %804 = vmatpush1.msra.mxu0 0.0
  %805 = vmatprep.subr.mxu0 0.0
  %806 = vmatpush1.msra.mxu0 0.0
  %807 = vmatprep.subr.mxu0 0.0
  %808 = vmatpush1.msra.mxu0 0.0
  %809 = vmatprep.subr.mxu0 0.0
  %810 = vmatpush1.msra.mxu0 0.0
  %811 = vmatprep.subr.mxu0 0.0
  %812 = vmatpush1.msra.mxu0 0.0
  %813 = vmatprep.subr.mxu0 0.0
  %814 = vmatpush1.msra.mxu0 0.0
  %815 = vmatprep.subr.mxu0 0.0
  %816 = vmatpush1.msra.mxu0 0.0
  %817 = vmatprep.subr.mxu0 %v708
  %818 = vmatpush1.msra.mxu0 %v705
  %819 = vmatprep.subr.mxu0 0.0
  %820 = vmatpush2.msra.mxu0 0.0
  %821 = vmatprep.subr.mxu0 0.0
  %822 = vmatpush2.msra.mxu0 0.0
  %823 = vmatprep.subr.mxu0 0.0
  %824 = vmatpush2.msra.mxu0 0.0
  %825 = vmatprep.subr.mxu0 0.0
  %826 = vmatpush2.msra.mxu0 0.0
  %827 = vmatprep.subr.mxu0 0.0
  %828 = vmatpush2.msra.mxu0 0.0
  %829 = vmatprep.subr.mxu0 0.0
  %830 = vmatpush2.msra.mxu0 0.0
  %831 = vmatprep.subr.mxu0 0.0
  %832 = vmatpush2.msra.mxu0 0.0
  %833 = vmatprep.subr.mxu0 0.0
  %834 = vmatpush2.msra.mxu0 0.0
  %835 = vmatprep.subr.mxu0 0.0
  %836 = vmatpush2.msra.mxu0 0.0
  %837 = vmatprep.subr.mxu0 0.0
  %838 = vmatpush2.msra.mxu0 0.0
  %839 = vmatprep.subr.mxu0 0.0
  %840 = vmatpush2.msra.mxu0 0.0
  %841 = vmatprep.subr.mxu0 0.0
  %842 = vmatpush2.msra.mxu0 0.0
  %843 = vmatprep.subr.mxu0 0.0
  %844 = vmatpush2.msra.mxu0 0.0
  %845 = vmatprep.subr.mxu0 0.0
  %846 = vmatpush2.msra.mxu0 0.0
  %847 = vmatprep.subr.mxu0 0.0
  %848 = vmatpush2.msra.mxu0 0.0
  %849 = vmatprep.subr.mxu0 0.0
  %850 = vmatpush2.msra.mxu0 0.0
  %851 = vmatprep.mubr.f32.mxu0 0.0
  %852 = vmatmul.mubr.f32.gmra.mxu0 %v693
  %v853 = vpop.f32.mrf.mxu0
  %v854 = vadd.f32 0.0, %v853
  %v855 = vpop.f32.mrf.mxu0
  %v856 = vadd.f32 0.0, %v855
  %857 = vmatprep.mubr.f32.mxu0 0.0
  %858 = vmatmul.mubr.f32.gmra.mxu0 %v696
  %v859 = vpop.f32.mrf.mxu0
  %v860 = vadd.f32 0.0, %v859
  %v861 = vpop.f32.mrf.mxu0
  %v862 = vadd.f32 0.0, %v861
  %863 = vdwg.mxu0
  %v864 = vld [vmem:[%s8] sm:$0xff]
  %v865 = vld [vmem:[%s8 + $0x8] sm:$0xff]
  %v866 = vld [vmem:[%s9] sm:$0xff]
  %v867 = vld [vmem:[%s9 + $0x8] sm:$0xff]
  %v868 = vadd.f32 %v777, %v779
  %v869 = vadd.f32 %v868, %v854
  %v870 = vadd.f32 %v869, %v856
  %871 = vadd.xlane.f32.xlu0 %v870
  %v872 = vpop.xlane.xlu0 %871
  %v873 = vadd.f32 %v783, %v785
  %v874 = vadd.f32 %v873, %v860
  %v875 = vadd.f32 %v874, %v862
  %876 = vadd.xlane.f32.xlu0 %v875
  %v877 = vpop.xlane.xlu0 %876
  %v878 = vmul.f32 %v777, %v777
  %v879 = vmul.f32 %v779, %v779
  %v880 = vmul.f32 %v854, %v854
  %v881 = vmul.f32 %v856, %v856
  %v882 = vmul.f32 %v783, %v783
  %v883 = vmul.f32 %v785, %v785
  %v884 = vmul.f32 %v860, %v860
  %v885 = vmul.f32 %v862, %v862
  %v886 = vadd.f32 %v878, %v879
  %v887 = vadd.f32 %v886, %v880
  %v888 = vadd.f32 %v887, %v881
  %889 = vadd.xlane.f32.xlu0 %v888
  %v890 = vpop.xlane.xlu0 %889
  %v891 = vadd.f32 %v882, %v883
  %v892 = vadd.f32 %v891, %v884
  %v893 = vadd.f32 %v892, %v885
  %894 = vadd.xlane.f32.xlu0 %v893
  %v895 = vpop.xlane.xlu0 %894
  %v896 = vmul.f32 %v872, 0.001953125
  %v897 = vmul.f32 %v877, 0.001953125
  %v898 = vmul.f32 %v890, 0.001953125
  %v899 = vmul.f32 %v895, 0.001953125
  %v900 = vmul.f32 %v896, %v896
  %v901 = vmul.f32 %v897, %v897
  %v902 = vsub.f32 %v898, %v900
  %v903 = vsub.f32 %v899, %v901
  %v904 = vadd.f32 %v902, 1e-05
  %v905 = vadd.f32 %v903, 1e-05
  %v906 = vrsqrt.pop %v904
  %v907 = vrsqrt.pop %v905
  %v908 = vmul.f32 %v864, %v906
  %v909 = vmul.f32 %v865, %v907
  %v910 = vmul.f32 %v896, %v908
  %v911 = vmul.f32 %v897, %v909
  %v912 = vsub.f32 %v866, %v910
  %v913 = vsub.f32 %v867, %v911
  %915 = vset.pattern.permute.xlu0 0
  %916 = vperm.xlu0 %915, %v908
  %v917 = vpop.permute.xlu0 %916
  %920 = vset.pattern.permute.xlu0 0
  %921 = vperm.xlu0 %920, %v909
  %v922 = vpop.permute.xlu0 %921
  %v924 = vmul.f32 %v777, %v917
  %v925 = vmul.f32 %v779, %v917
  %v926 = vmul.f32 %v854, %v917
  %v927 = vmul.f32 %v856, %v917
  %v928 = vmul.f32 %v783, %v922
  %v929 = vmul.f32 %v785, %v922
  %v930 = vmul.f32 %v860, %v922
  %v931 = vmul.f32 %v862, %v922
  %933 = vset.pattern.permute.xlu0 0
  %934 = vperm.xlu0 %933, %v912
  %v935 = vpop.permute.xlu0 %934
  %938 = vset.pattern.permute.xlu0 0
  %939 = vperm.xlu0 %938, %v913
  %v940 = vpop.permute.xlu0 %939
  %v942 = vadd.f32 %v924, %v935
  %v943 = vadd.f32 %v925, %v935
  %v944 = vadd.f32 %v926, %v935
  %v945 = vadd.f32 %v927, %v935
  %v946 = vadd.f32 %v928, %v940
  %v947 = vadd.f32 %v929, %v940
  %v948 = vadd.f32 %v930, %v940
  %v949 = vadd.f32 %v931, %v940
  %v950 = vadd.f32 %v942, %v36
  %v951 = vadd.f32 %v943, %v37
  %v952 = vadd.f32 %v944, %v38
  %v953 = vadd.f32 %v945, %v39
  %v954 = vadd.f32 %v946, %v40
  %v955 = vadd.f32 %v947, %v41
  %v956 = vadd.f32 %v948, %v42
  %v957 = vadd.f32 %v949, %v43
  %v958 = vmax.f32 %v950, 0.0
  %v959 = vmax.f32 %v951, 0.0
  %v960 = vmax.f32 %v952, 0.0
  %v961 = vmax.f32 %v953, 0.0
  %v962 = vmax.f32 %v954, 0.0
  %v963 = vmax.f32 %v955, 0.0
  %v964 = vmax.f32 %v956, 0.0
  %v965 = vmax.f32 %v957, 0.0
  %966 = vst [vmem:[%s10] sm:$0xff] %v958
  %967 = vst [vmem:[%s10 + $0x8] sm:$0xff] %v959
  %968 = vst [vmem:[%s10 + $0x10] sm:$0xff] %v960
  %969 = vst [vmem:[%s10 + $0x18] sm:$0xff] %v961
  %970 = vst [vmem:[%s10 + $0x20] sm:$0xff] %v962
  %971 = vst [vmem:[%s10 + $0x28] sm:$0xff] %v963
  %972 = vst [vmem:[%s10 + $0x30] sm:$0xff] %v964
  %973 = vst [vmem:[%s10 + $0x38] sm:$0xff] %v965
  // Predicated region
  $region42: #{bottleneck_forward.1} parent=0 // pred_check
    _
  $region43: #{bottleneck_forward.1} parent=0 // pred_check_branch
    %975 = sbr.rel (0) target = $region45
  $region44: #{bottleneck_forward.1} parent=0 // pred_region
    _
  $region45: #{bottleneck_forward.1} parent=0 // pred_fallthru
    _
  // Predicated region
  $region46: #{bottleneck_forward.1} parent=0 // pred_check
    _
  $region47: #{bottleneck_forward.1} parent=0 // pred_check_branch
    %977 = sbr.rel (0) target = $region49
  $region48: #{bottleneck_forward.1} parent=0 // pred_region
    _
  $region49: #{bottleneck_forward.1} parent=0 // pred_fallthru
    _

</llo_original>
